<compile_context>
chip_gen: v6e
topology: v6e:2x2x1
jax: 0.10.0
libtpu: 0.0.40
codegen_flags: <defaults>
</compile_context>

<pallas_src>
import jax
import jax.numpy as jnp
from jax.experimental import pallas as pl
from jax.experimental.pallas import tpu as pltpu

LANE = 128
SUBLANE = 8


def _round_up(x, m):
    return (x + m - 1) // m * m


def _classifier_kernel(q_ref, v_ref,
                       wq_ref, bq_ref,
                       wv_ref, bv_ref,
                       w1_ref, b1_ref,
                       w2_ref, b2_ref,
                       out_ref):
    # q_net / v_net: weight-normalized Linear + ReLU (weights pre-normalized,
    # pre-transposed and 128-lane padded in prepare_params).
    q_h = jnp.maximum(
        jnp.dot(q_ref[...], wq_ref[...], preferred_element_type=jnp.float32)
        + bq_ref[...], 0.0)
    v_h = jnp.maximum(
        jnp.dot(v_ref[...], wv_ref[...], preferred_element_type=jnp.float32)
        + bv_ref[...], 0.0)

    # joint representation: lane-aligned 128-wide elementwise product
    # (padded columns are 0 * 0 = 0, so downstream math is unaffected).
    joint = q_h * v_h

    # main[0..2]: Linear + ReLU (+ Dropout p=0 -> identity)
    h1 = jnp.maximum(
        jnp.dot(joint, w1_ref[...], preferred_element_type=jnp.float32)
        + b1_ref[...], 0.0)

    # main[3]: Linear -> logits. Compute stays 128-lane padded in VMEM; only
    # the first out_dim columns are written to HBM (narrow masked vst, but the
    # HBM output stream shrinks ~8x vs. storing the padded slab).
    logits = (jnp.dot(h1, w2_ref[...], preferred_element_type=jnp.float32)
              + b2_ref[...])
    out_dim = out_ref.shape[1]
    out_ref[...] = logits[:, :out_dim].astype(out_ref.dtype)


def prepare_params(params):
    """One-time parameter preparation.

    Folds weight_norm(dim=None) (w = g * v / ||v||_F, g scalar) into the
    weights, transposes to (in, out) layout, and zero-pads every output
    feature dim up to a multiple of 128 lanes. Run once, reuse across calls.
    """
    def wnorm(v, g):
        return g * v / jnp.sqrt(jnp.sum(v * v))

    def pad_w(w, rows, cols):
        return jnp.zeros((rows, cols), w.dtype).at[:w.shape[0], :w.shape[1]].set(w)

    def pad_b(b, cols):
        return jnp.zeros((1, cols), b.dtype).at[0, :b.shape[0]].set(b)

    in_q = params["q_v"].shape[1]
    in_v = params["v_v"].shape[1]
    hid0 = params["q_v"].shape[0]
    hid1 = params["w1"].shape[0]
    out_dim = params["w2"].shape[0]

    H0 = _round_up(hid0, LANE)
    H1 = _round_up(hid1, LANE)
    OP = _round_up(out_dim, LANE)

    wq = wnorm(params["q_v"], params["q_g"]).T     # (in_q, hid0)
    wv = wnorm(params["v_v"], params["v_g"]).T     # (in_v, hid0)

    return dict(
        wq=pad_w(wq, in_q, H0), bq=pad_b(params["bq"], H0),
        wv=pad_w(wv, in_v, H0), bv=pad_b(params["bv"], H0),
        w1=pad_w(params["w1"].T, H0, H1), b1=pad_b(params["b1"], H1),
        w2=pad_w(params["w2"].T, H1, OP), b2=pad_b(params["b2"], OP),
        out_dim=out_dim,
    )


def simple_classifier(q_emb, v_emb, prepped, *, batch_tile=2048):
    """Batch-tiled Pallas forward. `prepped` comes from prepare_params()."""
    B, in_q = q_emb.shape
    in_v = v_emb.shape[1]
    H0 = prepped["wq"].shape[1]
    H1 = prepped["w1"].shape[1]
    OP = prepped["w2"].shape[1]
    out_dim = prepped["out_dim"]

    # Batch tile: multiple of 8 sublanes. No input padding: the grid is
    # cdiv(B, TB) and the ragged last block's OOB rows are simply dropped on
    # store (rows are independent, so in-bounds results are exact).
    TB = _round_up(min(batch_tile, _round_up(B, SUBLANE)), SUBLANE)
    # v7x has 2 TensorCores: ensure >= 2 grid steps when possible so the
    # "parallel" batch axis actually shards across both cores.
    if pl.cdiv(B, TB) < 2 and B > SUBLANE:
        TB = _round_up(pl.cdiv(B, 2), SUBLANE)
    grid = (pl.cdiv(B, TB),)

    # Advisory cost estimate for the XLA scheduler.
    w_elems = (in_q * H0 + in_v * H0 + H0 * H1 + H1 * OP
               + 2 * H0 + H1 + OP)
    flops = 2 * B * (in_q * H0 + in_v * H0 + H0 * H1 + H1 * OP)
    bytes_accessed = 4 * (B * (in_q + in_v + out_dim) + w_elems)

    def act_spec(feat):
        return pl.BlockSpec((TB, feat), lambda i: (i, 0))

    def resident_spec(shape):
        # Constant block index -> DMA'd once, stays VMEM-resident.
        return pl.BlockSpec(shape, lambda i: (0, 0))

    out = pl.pallas_call(
        _classifier_kernel,
        out_shape=jax.ShapeDtypeStruct((B, out_dim), jnp.float32),
        grid=grid,
        in_specs=[
            act_spec(in_q), act_spec(in_v),
            resident_spec(prepped["wq"].shape), resident_spec(prepped["bq"].shape),
            resident_spec(prepped["wv"].shape), resident_spec(prepped["bv"].shape),
            resident_spec(prepped["w1"].shape), resident_spec(prepped["b1"].shape),
            resident_spec(prepped["w2"].shape), resident_spec(prepped["b2"].shape),
        ],
        # Last dim == full array dim (out_dim), so the (8,128) rule holds and
        # the HBM writeback is exactly the real logits, nothing more.
        out_specs=pl.BlockSpec((TB, out_dim), lambda i: (i, 0)),
        compiler_params=pltpu.CompilerParams(
            dimension_semantics=("parallel",),
            vmem_limit_bytes=32 * 1024 * 1024,
        ),
        cost_estimate=pl.CostEstimate(
            flops=flops, transcendentals=0, bytes_accessed=bytes_accessed),
    )(
        q_emb, v_emb,
        prepped["wq"], prepped["bq"],
        prepped["wv"], prepped["bv"],
        prepped["w1"], prepped["b1"],
        prepped["w2"], prepped["b2"],
    )
    return out


def make_params(key, in_dim, hid_dim, out_dim):
    """Deterministic synthetic parameters matching the module's shapes."""
    ks = jax.random.split(key, 4)
    in_q, in_v = in_dim
    hid0, hid1 = hid_dim

    def lin(k, out_f, in_f):
        kw, kb = jax.random.split(k)
        bound = 1.0 / jnp.sqrt(in_f)
        w = jax.random.uniform(kw, (out_f, in_f), jnp.float32, -bound, bound)
        b = jax.random.uniform(kb, (out_f,), jnp.float32, -bound, bound)
        return w, b

    q_v, bq = lin(ks[0], hid0, in_q)
    v_v, bv = lin(ks[1], hid0, in_v)
    w1, b1 = lin(ks[2], hid1, hid0)
    w2, b2 = lin(ks[3], out_dim, hid1)

    # weight_norm init: g = ||v||_F (normalized weight equals v at init)
    return dict(
        q_v=q_v, q_g=jnp.sqrt(jnp.sum(q_v * q_v)), bq=bq,
        v_v=v_v, v_g=jnp.sqrt(jnp.sum(v_v * v_v)), bv=bv,
        w1=w1, b1=b1,
        w2=w2, b2=b2,
    )


def _reference(q_emb, v_emb, p):
    def wnorm(v, g):
        return g * v / jnp.sqrt(jnp.sum(v * v))
    q_h = jnp.maximum(q_emb @ wnorm(p["q_v"], p["q_g"]).T + p["bq"], 0.0)
    v_h = jnp.maximum(v_emb @ wnorm(p["v_v"], p["v_g"]).T + p["bv"], 0.0)
    joint = q_h * v_h
    h1 = jnp.maximum(joint @ p["w1"].T + p["b1"], 0.0)
    return h1 @ p["w2"].T + p["b2"]


if __name__ == "__main__":
    key = jax.random.PRNGKey(0)
    k_q, k_v, k_p = jax.random.split(key, 3)

    B = 20                 # deliberately not a multiple of the batch tile
    in_dim = (32, 48)      # (question feature dim, video feature dim)
    hid_dim = (64, 32)     # (hid_dim[0], hid_dim[1])
    out_dim = 16

    q_emb = jax.random.normal(k_q, (B, in_dim[0]), jnp.float32)
    v_emb = jax.random.normal(k_v, (B, in_dim[1]), jnp.float32)
    params = make_params(k_p, in_dim, hid_dim, out_dim)

    prepped = prepare_params(params)   # one-time parameter preparation
    ref = _reference(q_emb, v_emb, params)

    # 1) small batch_tile: multiple grid steps + ragged last block (20 = 2*8+4)
    logits = simple_classifier(q_emb, v_emb, prepped, batch_tile=8)
    logits = jax.block_until_ready(logits)
    assert logits.shape == (B, out_dim)
    assert jnp.allclose(logits, ref, atol=1e-4, rtol=1e-4)

    # 2) default batch_tile: exercises the >=2-grid-step (megacore) split path
    logits2 = jax.block_until_ready(simple_classifier(q_emb, v_emb, prepped))
    assert logits2.shape == (B, out_dim)
    assert jnp.allclose(logits2, ref, atol=1e-4, rtol=1e-4)

    print("KERNEL_OK")
</pallas_src>

<mosaic_0001>
module attributes {stable_mosaic.version = 11 : i64} {
  func.func @_classifier_kernel(%arg0: i32, %arg1: memref<8x32xf32, #tpu.memory_space<vmem>>, %arg2: memref<8x48xf32, #tpu.memory_space<vmem>>, %arg3: memref<32x128xf32, #tpu.memory_space<vmem>>, %arg4: memref<1x128xf32, #tpu.memory_space<vmem>>, %arg5: memref<48x128xf32, #tpu.memory_space<vmem>>, %arg6: memref<1x128xf32, #tpu.memory_space<vmem>>, %arg7: memref<128x128xf32, #tpu.memory_space<vmem>>, %arg8: memref<1x128xf32, #tpu.memory_space<vmem>>, %arg9: memref<128x128xf32, #tpu.memory_space<vmem>>, %arg10: memref<1x128xf32, #tpu.memory_space<vmem>>, %arg11: memref<8x16xf32, #tpu.memory_space<vmem>>) attributes {dimension_semantics = [#tpu.dimension_semantics<parallel>], iteration_bounds = array<i64: 3>, scalar_prefetch = 0 : i64, scratch_operands = 0 : i64, tpu.core_type = #tpu.core_type<tc>, window_params = [{transform_indices = @transform_0, window_bounds = array<i64: 8, 32>}, {transform_indices = @transform_1, window_bounds = array<i64: 8, 48>}, {pipeline_mode = #tpu.pipeline_mode<synchronous>, transform_indices = @transform_2, window_bounds = array<i64: 32, 128>}, {pipeline_mode = #tpu.pipeline_mode<synchronous>, transform_indices = @transform_3, window_bounds = array<i64: 1, 128>}, {pipeline_mode = #tpu.pipeline_mode<synchronous>, transform_indices = @transform_4, window_bounds = array<i64: 48, 128>}, {pipeline_mode = #tpu.pipeline_mode<synchronous>, transform_indices = @transform_5, window_bounds = array<i64: 1, 128>}, {pipeline_mode = #tpu.pipeline_mode<synchronous>, transform_indices = @transform_6, window_bounds = array<i64: 128, 128>}, {pipeline_mode = #tpu.pipeline_mode<synchronous>, transform_indices = @transform_7, window_bounds = array<i64: 1, 128>}, {pipeline_mode = #tpu.pipeline_mode<synchronous>, transform_indices = @transform_8, window_bounds = array<i64: 128, 128>}, {pipeline_mode = #tpu.pipeline_mode<synchronous>, transform_indices = @transform_9, window_bounds = array<i64: 1, 128>}, {transform_indices = @transform_10, window_bounds = array<i64: 8, 16>}]} {
    %c0 = arith.constant 0 : index
    %c0_0 = arith.constant 0 : index
    %0 = vector.load %arg1[%c0, %c0_0] : memref<8x32xf32, #tpu.memory_space<vmem>>, vector<8x32xf32>
    %c0_1 = arith.constant 0 : index
    %c0_2 = arith.constant 0 : index
    %1 = vector.load %arg3[%c0_1, %c0_2] : memref<32x128xf32, #tpu.memory_space<vmem>>, vector<32x128xf32>
    %cst = arith.constant dense<0.000000e+00> : vector<8x128xf32>
    %2 = tpu.matmul %0, %1, %cst {dimension_numbers = #tpu.dot_dimension_numbers<[1], [0], [0], [1], [0, 0, 1, 1], [], []>} : vector<8x32xf32>, vector<32x128xf32>, vector<8x128xf32> -> vector<8x128xf32>
    %c0_3 = arith.constant 0 : index
    %c0_4 = arith.constant 0 : index
    %3 = vector.load %arg4[%c0_3, %c0_4] : memref<1x128xf32, #tpu.memory_space<vmem>>, vector<1x128xf32>
    %4 = vector.broadcast %3 : vector<1x128xf32> to vector<8x128xf32>
    %5 = arith.addf %2, %4 : vector<8x128xf32>
    %cst_5 = arith.constant 0.000000e+00 : f32
    %6 = vector.broadcast %cst_5 : f32 to vector<8x128xf32>
    %7 = arith.maximumf %5, %6 : vector<8x128xf32>
    %c0_6 = arith.constant 0 : index
    %c0_7 = arith.constant 0 : index
    %8 = vector.load %arg2[%c0_6, %c0_7] : memref<8x48xf32, #tpu.memory_space<vmem>>, vector<8x48xf32>
    %c0_8 = arith.constant 0 : index
    %c0_9 = arith.constant 0 : index
    %9 = vector.load %arg5[%c0_8, %c0_9] : memref<48x128xf32, #tpu.memory_space<vmem>>, vector<48x128xf32>
    %cst_10 = arith.constant dense<0.000000e+00> : vector<8x128xf32>
    %10 = tpu.matmul %8, %9, %cst_10 {dimension_numbers = #tpu.dot_dimension_numbers<[1], [0], [0], [1], [0, 0, 1, 1], [], []>} : vector<8x48xf32>, vector<48x128xf32>, vector<8x128xf32> -> vector<8x128xf32>
    %c0_11 = arith.constant 0 : index
    %c0_12 = arith.constant 0 : index
    %11 = vector.load %arg6[%c0_11, %c0_12] : memref<1x128xf32, #tpu.memory_space<vmem>>, vector<1x128xf32>
    %12 = vector.broadcast %11 : vector<1x128xf32> to vector<8x128xf32>
    %13 = arith.addf %10, %12 : vector<8x128xf32>
    %cst_13 = arith.constant 0.000000e+00 : f32
    %14 = vector.broadcast %cst_13 : f32 to vector<8x128xf32>
    %15 = arith.maximumf %13, %14 : vector<8x128xf32>
    %16 = arith.mulf %7, %15 : vector<8x128xf32>
    %c0_14 = arith.constant 0 : index
    %c0_15 = arith.constant 0 : index
    %17 = vector.load %arg7[%c0_14, %c0_15] : memref<128x128xf32, #tpu.memory_space<vmem>>, vector<128x128xf32>
    %cst_16 = arith.constant dense<0.000000e+00> : vector<8x128xf32>
    %18 = tpu.matmul %16, %17, %cst_16 {dimension_numbers = #tpu.dot_dimension_numbers<[1], [0], [0], [1], [0, 0, 1, 1], [], []>} : vector<8x128xf32>, vector<128x128xf32>, vector<8x128xf32> -> vector<8x128xf32>
    %c0_17 = arith.constant 0 : index
    %c0_18 = arith.constant 0 : index
    %19 = vector.load %arg8[%c0_17, %c0_18] : memref<1x128xf32, #tpu.memory_space<vmem>>, vector<1x128xf32>
    %20 = vector.broadcast %19 : vector<1x128xf32> to vector<8x128xf32>
    %21 = arith.addf %18, %20 : vector<8x128xf32>
    %cst_19 = arith.constant 0.000000e+00 : f32
    %22 = vector.broadcast %cst_19 : f32 to vector<8x128xf32>
    %23 = arith.maximumf %21, %22 : vector<8x128xf32>
    %c0_20 = arith.constant 0 : index
    %c0_21 = arith.constant 0 : index
    %24 = vector.load %arg9[%c0_20, %c0_21] : memref<128x128xf32, #tpu.memory_space<vmem>>, vector<128x128xf32>
    %cst_22 = arith.constant dense<0.000000e+00> : vector<8x128xf32>
    %25 = tpu.matmul %23, %24, %cst_22 {dimension_numbers = #tpu.dot_dimension_numbers<[1], [0], [0], [1], [0, 0, 1, 1], [], []>} : vector<8x128xf32>, vector<128x128xf32>, vector<8x128xf32> -> vector<8x128xf32>
    %c0_23 = arith.constant 0 : index
    %c0_24 = arith.constant 0 : index
    %26 = vector.load %arg10[%c0_23, %c0_24] : memref<1x128xf32, #tpu.memory_space<vmem>>, vector<1x128xf32>
    %27 = vector.broadcast %26 : vector<1x128xf32> to vector<8x128xf32>
    %28 = arith.addf %25, %27 : vector<8x128xf32>
    %29 = vector.extract_strided_slice %28 {offsets = [0, 0], sizes = [8, 16], strides = [1, 1]} : vector<8x128xf32> to vector<8x16xf32>
    %c0_25 = arith.constant 0 : index
    %c0_26 = arith.constant 0 : index
    %30 = vector.load %arg11[%c0_25, %c0_26] : memref<8x16xf32, #tpu.memory_space<vmem>>, vector<8x16xf32>
    tpu.vector_store %arg11[%c0_25, %c0_26], %29 {strides = array<i32>} : memref<8x16xf32, #tpu.memory_space<vmem>>, vector<8x16xf32>,
    return
  }
  func.func @transform_0(%arg0: i32) -> (i32, i32) {
    %c0_i32 = arith.constant 0 : i32
    %c0_i32_0 = arith.constant 0 : i32
    return %arg0, %c0_i32 : i32, i32
  }
  func.func @transform_1(%arg0: i32) -> (i32, i32) {
    %c0_i32 = arith.constant 0 : i32
    %c0_i32_0 = arith.constant 0 : i32
    return %arg0, %c0_i32 : i32, i32
  }
  func.func @transform_2(%arg0: i32) -> (i32, i32) {
    %c0_i32 = arith.constant 0 : i32
    %c0_i32_0 = arith.constant 0 : i32
    %c0_i32_1 = arith.constant 0 : i32
    return %c0_i32, %c0_i32_0 : i32, i32
  }
  func.func @transform_3(%arg0: i32) -> (i32, i32) {
    %c0_i32 = arith.constant 0 : i32
    %c0_i32_0 = arith.constant 0 : i32
    %c0_i32_1 = arith.constant 0 : i32
    return %c0_i32, %c0_i32_0 : i32, i32
  }
  func.func @transform_4(%arg0: i32) -> (i32, i32) {
    %c0_i32 = arith.constant 0 : i32
    %c0_i32_0 = arith.constant 0 : i32
    %c0_i32_1 = arith.constant 0 : i32
    return %c0_i32, %c0_i32_0 : i32, i32
  }
  func.func @transform_5(%arg0: i32) -> (i32, i32) {
    %c0_i32 = arith.constant 0 : i32
    %c0_i32_0 = arith.constant 0 : i32
    %c0_i32_1 = arith.constant 0 : i32
    return %c0_i32, %c0_i32_0 : i32, i32
  }
  func.func @transform_6(%arg0: i32) -> (i32, i32) {
    %c0_i32 = arith.constant 0 : i32
    %c0_i32_0 = arith.constant 0 : i32
    %c0_i32_1 = arith.constant 0 : i32
    return %c0_i32, %c0_i32_0 : i32, i32
  }
  func.func @transform_7(%arg0: i32) -> (i32, i32) {
    %c0_i32 = arith.constant 0 : i32
    %c0_i32_0 = arith.constant 0 : i32
    %c0_i32_1 = arith.constant 0 : i32
    return %c0_i32, %c0_i32_0 : i32, i32
  }
  func.func @transform_8(%arg0: i32) -> (i32, i32) {
    %c0_i32 = arith.constant 0 : i32
    %c0_i32_0 = arith.constant 0 : i32
    %c0_i32_1 = arith.constant 0 : i32
    return %c0_i32, %c0_i32_0 : i32, i32
  }
  func.func @transform_9(%arg0: i32) -> (i32, i32) {
    %c0_i32 = arith.constant 0 : i32
    %c0_i32_0 = arith.constant 0 : i32
    %c0_i32_1 = arith.constant 0 : i32
    return %c0_i32, %c0_i32_0 : i32, i32
  }
  func.func @transform_10(%arg0: i32) -> (i32, i32) {
    %c0_i32 = arith.constant 0 : i32
    %c0_i32_0 = arith.constant 0 : i32
    return %arg0, %c0_i32 : i32, i32
  }
}

</mosaic_0001>

<llo_original>
// kernel: tpu_custom_call.1
$region0: #{tpu_custom_call.1}
  #allocation0 [shape = 'u32[]', space=smem, size = 0x4, offset = 0x4, fixed_abs, tag = 'smem constant byte address 0x4 - core index']
  #allocation1 [shape = 'u32[144,128]{1,0:T(1,128)}', space=vmem, size = 0x12000, scoped, tag = 'internal scratch']
  %s0 = inlined_call_operand.hbm [shape: f32[20,32], index: 0, kind: input, shape index: {}]
  %s1 = inlined_call_operand.hbm [shape: f32[20,48], index: 1, kind: input, shape index: {}]
  %s2 = inlined_call_operand.hbm [shape: f32[32,128], index: 2, kind: input, shape index: {}]
  %s3 = inlined_call_operand.vmem [shape: f32[1,128], index: 3, kind: input, shape index: {}]
  %s4 = inlined_call_operand.hbm [shape: f32[48,128], index: 4, kind: input, shape index: {}]
  %s5 = inlined_call_operand.vmem [shape: f32[1,128], index: 5, kind: input, shape index: {}]
  %s6 = inlined_call_operand.hbm [shape: f32[128,128], index: 6, kind: input, shape index: {}]
  %s7 = inlined_call_operand.vmem [shape: f32[1,128], index: 7, kind: input, shape index: {}]
  %s8 = inlined_call_operand.hbm [shape: f32[128,128], index: 8, kind: input, shape index: {}]
  %s9 = inlined_call_operand.vmem [shape: f32[1,128], index: 9, kind: input, shape index: {}]
  %s10 = inlined_call_operand.vmem [shape: f32[20,16], index: 10, kind: output, shape index: {}]
  %s11 = sld [smem:[#allocation0]]
  $region97: #{tpu_custom_call.1} parent=0
    _
  %s13 = ssub.s32 1, %s11
  %s14 = scalar_select 0, %s13, %s11
  $region1: #{tpu_custom_call.1} parent=0
    #allocation2 [shape = 'u8[8192]{0}', space=vmem, size = 0x2000, scoped, tag = 'input window, operand 0']
    #allocation3 [shape = 's32[2]{0}', space=sflag, size = 0x8, scoped, tag = 'scoped memory for tpu_custom_call.1']
    #allocation4 [shape = 'u8[8192]{0}', space=vmem, size = 0x2000, scoped, tag = 'input window, operand 1']
    #allocation5 [shape = 's32[2]{0}', space=sflag, size = 0x8, scoped, tag = 'scoped memory for tpu_custom_call.1']
    #allocation6 [shape = 'u8[16384]{0}', space=vmem, size = 0x4000, scoped, tag = 'input window, operand 2, single buffered']
    #allocation7 [shape = 'u8[24576]{0}', space=vmem, size = 0x6000, scoped, tag = 'input window, operand 4, single buffered']
    #allocation8 [shape = 's32[1]{0}', space=sflag, size = 0x4, scoped, tag = 'scoped memory for tpu_custom_call.1']
    #allocation9 [shape = 'u8[65536]{0}', space=vmem, size = 0x10000, scoped, tag = 'input window, operand 6, single buffered']
    #allocation10 [shape = 'u8[65536]{0}', space=vmem, size = 0x10000, scoped, tag = 'input window, operand 8, single buffered']
    #allocation11 [shape = 's32[1]{0}', space=sflag, size = 0x4, scoped, tag = 'scoped memory for tpu_custom_call.1']
    %15 = vsyncpa [#allocation3], 0
    %s16 = scalar_lea.sflag [#allocation3], 1
    %17 = vsyncpa %s16, 0
    %18 = vsyncpa [#allocation5], 0
    %s19 = scalar_lea.sflag [#allocation5], 1
    %20 = vsyncpa %s19, 0
    %21 = vsyncpa [#allocation8], 0
    %22 = vsyncpa [#allocation11], 0
    loop: start=0, step=1, limit=5
    $region2: #{tpu_custom_call.1} parent=1 // loop_pre_header
      _
    $region3: #{tpu_custom_call.1} parent=1 // loop_header
      %s24 = sphi 0, %s28
      %p25 = scmp.ge.s32.totalorder %s24, 5
      %s34 = sphi 0, %s36
      %s37 = sphi 0, %s34
      %s38 = sphi 0, %s37
      %s54 = sphi 0, %s38
      %s60 = sphi 0, %s62
      %s63 = sphi 0, %s60
      %s64 = sphi 0, %s63
      %s80 = sphi 0, %s64
      %s84 = sphi 0, %s84
      %s86 = sphi 0, %s84
      %s87 = sphi 0, %s86
      %s101 = sphi 0, %s87
      %s105 = sphi 0, %s105
      %s107 = sphi 0, %s105
      %s108 = sphi 0, %s107
      %s122 = sphi 0, %s108
      %s126 = sphi 0, %s126
      %s128 = sphi 0, %s126
      %s129 = sphi 0, %s128
      %s143 = sphi 0, %s129
      %s147 = sphi 0, %s147
      %s149 = sphi 0, %s147
      %s150 = sphi 0, %s149
      %s164 = sphi 0, %s150
      %s168 = sphi 0, %s168
      %s170 = sphi 0, %s168
      %s171 = sphi 0, %s170
      %s185 = sphi 0, %s171
      %s189 = sphi 0, %s189
      %s191 = sphi 0, %s189
      %s192 = sphi 0, %s191
      %s206 = sphi 0, %s192
      %s210 = sphi 0, %s210
      %s212 = sphi 0, %s210
      %s213 = sphi 0, %s212
      %s227 = sphi 0, %s213
      %s231 = sphi 0, %s231
      %s233 = sphi 0, %s231
      %s234 = sphi 0, %s233
      %s248 = sphi 0, %s234
      %s254 = sphi 0, %s256
      %s257 = sphi 0, %s254
      %s258 = sphi 0, %s257
      %s274 = sphi 0, %s258
    $region4: #{tpu_custom_call.1} parent=1 // loop_header_branch
      %27 = sbr.rel (%p25) target = $region8
    $region5: #{tpu_custom_call.1} parent=1 // loop_body
      %s29 = ssub.s32 %s24, 1
      %s30 = ssub.s32 %s24, 2
      %s31 = sadd.s32 %s24, 1
      %s32 = ssub.s32 %s24, %s31
      %p33 = scmp.eq.s32.totalorder %s32, 0
      %s35 = sadd.s32 %s34, 1
      %s36 = scalar_select %p33, %s34, %s35
      %p39 = pneg %p33
      %p40 = scmp.eq.s32.totalorder %s24, 2
      %p41 = por %p39, %p40
      %p42 = scmp.ne.s32.totalorder %s34, %s37
      %p43 = scmp.eq.s32.totalorder %s24, 0
      %p44 = por %p42, %p43
      %p45 = scmp.ne.s32.totalorder %s34, %s37
      %p46 = scmp.eq.s32.totalorder %s29, 2
      %p47 = por %p45, %p46
      %p48 = scmp.ne.s32.totalorder %s37, %s38
      %p49 = scmp.eq.s32.totalorder %s29, 0
      %p50 = por %p48, %p49
      %p51 = scmp.ne.s32.totalorder %s37, %s38
      %p52 = scmp.eq.s32.totalorder %s30, 2
      %p53 = por %p51, %p52
      %p55 = scmp.ne.s32.totalorder %s38, %s54
      %p56 = scmp.eq.s32.totalorder %s30, 0
      %p57 = por %p55, %p56
      %s58 = ssub.s32 %s24, %s31
      %p59 = scmp.eq.s32.totalorder %s58, 0
      %s61 = sadd.s32 %s60, 1
      %s62 = scalar_select %p59, %s60, %s61
      %p65 = pneg %p59
      %p66 = scmp.eq.s32.totalorder %s24, 2
      %p67 = por %p65, %p66
      %p68 = scmp.ne.s32.totalorder %s60, %s63
      %p69 = scmp.eq.s32.totalorder %s24, 0
      %p70 = por %p68, %p69
      %p71 = scmp.ne.s32.totalorder %s60, %s63
      %p72 = scmp.eq.s32.totalorder %s29, 2
      %p73 = por %p71, %p72
      %p74 = scmp.ne.s32.totalorder %s63, %s64
      %p75 = scmp.eq.s32.totalorder %s29, 0
      %p76 = por %p74, %p75
      %p77 = scmp.ne.s32.totalorder %s63, %s64
      %p78 = scmp.eq.s32.totalorder %s30, 2
      %p79 = por %p77, %p78
      %p81 = scmp.ne.s32.totalorder %s64, %s80
      %p82 = scmp.eq.s32.totalorder %s30, 0
      %p83 = por %p81, %p82
      %s85 = sadd.s32 %s84, 1
      %p88 = scmp.eq.s32.totalorder %s24, 2
      %p89 = scmp.ne.s32.totalorder %s84, %s86
      %p90 = scmp.eq.s32.totalorder %s24, 0
      %p91 = por %p89, %p90
      %p92 = scmp.ne.s32.totalorder %s84, %s86
      %p93 = scmp.eq.s32.totalorder %s29, 2
      %p94 = por %p92, %p93
      %p95 = scmp.ne.s32.totalorder %s86, %s87
      %p96 = scmp.eq.s32.totalorder %s29, 0
      %p97 = por %p95, %p96
      %p98 = scmp.ne.s32.totalorder %s86, %s87
      %p99 = scmp.eq.s32.totalorder %s30, 2
      %p100 = por %p98, %p99
      %p102 = scmp.ne.s32.totalorder %s87, %s101
      %p103 = scmp.eq.s32.totalorder %s30, 0
      %p104 = por %p102, %p103
      %s106 = sadd.s32 %s105, 1
      %p109 = scmp.eq.s32.totalorder %s24, 2
      %p110 = scmp.ne.s32.totalorder %s105, %s107
      %p111 = scmp.eq.s32.totalorder %s24, 0
      %p112 = por %p110, %p111
      %p113 = scmp.ne.s32.totalorder %s105, %s107
      %p114 = scmp.eq.s32.totalorder %s29, 2
      %p115 = por %p113, %p114
      %p116 = scmp.ne.s32.totalorder %s107, %s108
      %p117 = scmp.eq.s32.totalorder %s29, 0
      %p118 = por %p116, %p117
      %p119 = scmp.ne.s32.totalorder %s107, %s108
      %p120 = scmp.eq.s32.totalorder %s30, 2
      %p121 = por %p119, %p120
      %p123 = scmp.ne.s32.totalorder %s108, %s122
      %p124 = scmp.eq.s32.totalorder %s30, 0
      %p125 = por %p123, %p124
      %s127 = sadd.s32 %s126, 1
      %p130 = scmp.eq.s32.totalorder %s24, 2
      %p131 = scmp.ne.s32.totalorder %s126, %s128
      %p132 = scmp.eq.s32.totalorder %s24, 0
      %p133 = por %p131, %p132
      %p134 = scmp.ne.s32.totalorder %s126, %s128
      %p135 = scmp.eq.s32.totalorder %s29, 2
      %p136 = por %p134, %p135
      %p137 = scmp.ne.s32.totalorder %s128, %s129
      %p138 = scmp.eq.s32.totalorder %s29, 0
      %p139 = por %p137, %p138
      %p140 = scmp.ne.s32.totalorder %s128, %s129
      %p141 = scmp.eq.s32.totalorder %s30, 2
      %p142 = por %p140, %p141
      %p144 = scmp.ne.s32.totalorder %s129, %s143
      %p145 = scmp.eq.s32.totalorder %s30, 0
      %p146 = por %p144, %p145
      %s148 = sadd.s32 %s147, 1
      %p151 = scmp.eq.s32.totalorder %s24, 2
      %p152 = scmp.ne.s32.totalorder %s147, %s149
      %p153 = scmp.eq.s32.totalorder %s24, 0
      %p154 = por %p152, %p153
      %p155 = scmp.ne.s32.totalorder %s147, %s149
      %p156 = scmp.eq.s32.totalorder %s29, 2
      %p157 = por %p155, %p156
      %p158 = scmp.ne.s32.totalorder %s149, %s150
      %p159 = scmp.eq.s32.totalorder %s29, 0
      %p160 = por %p158, %p159
      %p161 = scmp.ne.s32.totalorder %s149, %s150
      %p162 = scmp.eq.s32.totalorder %s30, 2
      %p163 = por %p161, %p162
      %p165 = scmp.ne.s32.totalorder %s150, %s164
      %p166 = scmp.eq.s32.totalorder %s30, 0
      %p167 = por %p165, %p166
      %s169 = sadd.s32 %s168, 1
      %p172 = scmp.eq.s32.totalorder %s24, 2
      %p173 = scmp.ne.s32.totalorder %s168, %s170
      %p174 = scmp.eq.s32.totalorder %s24, 0
      %p175 = por %p173, %p174
      %p176 = scmp.ne.s32.totalorder %s168, %s170
      %p177 = scmp.eq.s32.totalorder %s29, 2
      %p178 = por %p176, %p177
      %p179 = scmp.ne.s32.totalorder %s170, %s171
      %p180 = scmp.eq.s32.totalorder %s29, 0
      %p181 = por %p179, %p180
      %p182 = scmp.ne.s32.totalorder %s170, %s171
      %p183 = scmp.eq.s32.totalorder %s30, 2
      %p184 = por %p182, %p183
      %p186 = scmp.ne.s32.totalorder %s171, %s185
      %p187 = scmp.eq.s32.totalorder %s30, 0
      %p188 = por %p186, %p187
      %s190 = sadd.s32 %s189, 1
      %p193 = scmp.eq.s32.totalorder %s24, 2
      %p194 = scmp.ne.s32.totalorder %s189, %s191
      %p195 = scmp.eq.s32.totalorder %s24, 0
      %p196 = por %p194, %p195
      %p197 = scmp.ne.s32.totalorder %s189, %s191
      %p198 = scmp.eq.s32.totalorder %s29, 2
      %p199 = por %p197, %p198
      %p200 = scmp.ne.s32.totalorder %s191, %s192
      %p201 = scmp.eq.s32.totalorder %s29, 0
      %p202 = por %p200, %p201
      %p203 = scmp.ne.s32.totalorder %s191, %s192
      %p204 = scmp.eq.s32.totalorder %s30, 2
      %p205 = por %p203, %p204
      %p207 = scmp.ne.s32.totalorder %s192, %s206
      %p208 = scmp.eq.s32.totalorder %s30, 0
      %p209 = por %p207, %p208
      %s211 = sadd.s32 %s210, 1
      %p214 = scmp.eq.s32.totalorder %s24, 2
      %p215 = scmp.ne.s32.totalorder %s210, %s212
      %p216 = scmp.eq.s32.totalorder %s24, 0
      %p217 = por %p215, %p216
      %p218 = scmp.ne.s32.totalorder %s210, %s212
      %p219 = scmp.eq.s32.totalorder %s29, 2
      %p220 = por %p218, %p219
      %p221 = scmp.ne.s32.totalorder %s212, %s213
      %p222 = scmp.eq.s32.totalorder %s29, 0
      %p223 = por %p221, %p222
      %p224 = scmp.ne.s32.totalorder %s212, %s213
      %p225 = scmp.eq.s32.totalorder %s30, 2
      %p226 = por %p224, %p225
      %p228 = scmp.ne.s32.totalorder %s213, %s227
      %p229 = scmp.eq.s32.totalorder %s30, 0
      %p230 = por %p228, %p229
      %s232 = sadd.s32 %s231, 1
      %p235 = scmp.eq.s32.totalorder %s24, 2
      %p236 = scmp.ne.s32.totalorder %s231, %s233
      %p237 = scmp.eq.s32.totalorder %s24, 0
      %p238 = por %p236, %p237
      %p239 = scmp.ne.s32.totalorder %s231, %s233
      %p240 = scmp.eq.s32.totalorder %s29, 2
      %p241 = por %p239, %p240
      %p242 = scmp.ne.s32.totalorder %s233, %s234
      %p243 = scmp.eq.s32.totalorder %s29, 0
      %p244 = por %p242, %p243
      %p245 = scmp.ne.s32.totalorder %s233, %s234
      %p246 = scmp.eq.s32.totalorder %s30, 2
      %p247 = por %p245, %p246
      %p249 = scmp.ne.s32.totalorder %s234, %s248
      %p250 = scmp.eq.s32.totalorder %s30, 0
      %p251 = por %p249, %p250
      %s252 = ssub.s32 %s24, %s31
      %p253 = scmp.eq.s32.totalorder %s252, 0
      %s255 = sadd.s32 %s254, 1
      %s256 = scalar_select %p253, %s254, %s255
      %p259 = pneg %p253
      %p260 = scmp.eq.s32.totalorder %s24, 2
      %p261 = por %p259, %p260
      %p262 = scmp.ne.s32.totalorder %s254, %s257
      %p263 = scmp.eq.s32.totalorder %s24, 0
      %p264 = por %p262, %p263
      %p265 = scmp.ne.s32.totalorder %s254, %s257
      %p266 = scmp.eq.s32.totalorder %s29, 2
      %p267 = por %p265, %p266
      %p268 = scmp.ne.s32.totalorder %s257, %s258
      %p269 = scmp.eq.s32.totalorder %s29, 0
      %p270 = por %p268, %p269
      %p271 = scmp.ne.s32.totalorder %s257, %s258
      %p272 = scmp.eq.s32.totalorder %s30, 2
      %p273 = por %p271, %p272
      %p275 = scmp.ne.s32.totalorder %s258, %s274
      %p276 = scmp.eq.s32.totalorder %s30, 0
      %p277 = por %p275, %p276
      %p278 = scmp.le.s32.totalorder 1, %s24
      %p279 = scmp.lt.s32.totalorder %s24, 4
      %p280 = pnand %p278, %p279
      %p281 = pneg %p280
      // Predicated region
      $region9: #{tpu_custom_call.1} parent=5 // pred_check
        _
      $region10: #{tpu_custom_call.1} parent=5 // pred_check_branch
        %283 = sbr.rel (%p280) target = $region12
      $region11: #{tpu_custom_call.1} parent=5 // pred_region
        %s284 = ssub.s32 %s24, 1
        // Predicated region
        $region13: #{tpu_custom_call.1} parent=11 // pred_check
          %p285 = pneg %p97
        $region14: #{tpu_custom_call.1} parent=11 // pred_check_branch
          %287 = sbr.rel (%p285) target = $region16
        $region15: #{tpu_custom_call.1} parent=11 // pred_region
          %s289 = ssub.s32 512, 512
          %290 = vsyncadd [#allocation5], %s289
          %s291 = sshll.u32 [#allocation6], 4
          %s292 = int_to_ptr.vmem [resolvable:$true] %s291
          %297 = dma.hbm_to_vmem [thread:$0]  %s2, 512, %s292, [#allocation5], 128, 128, 8
        $region16: #{tpu_custom_call.1} parent=11 // pred_fallthru
          _
        // Predicated region
        $region17: #{tpu_custom_call.1} parent=11 // pred_check
          %p298 = pneg %p118
        $region18: #{tpu_custom_call.1} parent=11 // pred_check_branch
          %300 = sbr.rel (%p298) target = $region20
        $region19: #{tpu_custom_call.1} parent=11 // pred_region
          _
        $region20: #{tpu_custom_call.1} parent=11 // pred_fallthru
          _
        // Predicated region
        $region21: #{tpu_custom_call.1} parent=11 // pred_check
          %p301 = pneg %p139
        $region22: #{tpu_custom_call.1} parent=11 // pred_check_branch
          %303 = sbr.rel (%p301) target = $region24
        $region23: #{tpu_custom_call.1} parent=11 // pred_region
          %s305 = ssub.s32 768, 768
          %306 = vsyncadd [#allocation8], %s305
          %s307 = sshll.u32 [#allocation7], 4
          %s308 = int_to_ptr.vmem [resolvable:$true] %s307
          %313 = dma.hbm_to_vmem [thread:$0]  %s4, 768, %s308, [#allocation8], 128, 128, 8
        $region24: #{tpu_custom_call.1} parent=11 // pred_fallthru
          _
        // Predicated region
        $region25: #{tpu_custom_call.1} parent=11 // pred_check
          %p314 = pneg %p160
        $region26: #{tpu_custom_call.1} parent=11 // pred_check_branch
          %316 = sbr.rel (%p314) target = $region28
        $region27: #{tpu_custom_call.1} parent=11 // pred_region
          _
        $region28: #{tpu_custom_call.1} parent=11 // pred_fallthru
          _
        // Predicated region
        $region29: #{tpu_custom_call.1} parent=11 // pred_check
          %p317 = pneg %p181
        $region30: #{tpu_custom_call.1} parent=11 // pred_check_branch
          %319 = sbr.rel (%p317) target = $region32
        $region31: #{tpu_custom_call.1} parent=11 // pred_region
          %s321 = ssub.s32 2048, 2048
          %322 = vsyncadd [#allocation8], %s321
          %s323 = sshll.u32 [#allocation9], 4
          %s324 = int_to_ptr.vmem [resolvable:$true] %s323
          %329 = dma.hbm_to_vmem [thread:$0]  %s6, 2048, %s324, [#allocation8], 128, 128, 8
        $region32: #{tpu_custom_call.1} parent=11 // pred_fallthru
          _
        // Predicated region
        $region33: #{tpu_custom_call.1} parent=11 // pred_check
          %p330 = pneg %p202
        $region34: #{tpu_custom_call.1} parent=11 // pred_check_branch
          %332 = sbr.rel (%p330) target = $region36
        $region35: #{tpu_custom_call.1} parent=11 // pred_region
          _
        $region36: #{tpu_custom_call.1} parent=11 // pred_fallthru
          _
        // Predicated region
        $region37: #{tpu_custom_call.1} parent=11 // pred_check
          %p333 = pneg %p223
        $region38: #{tpu_custom_call.1} parent=11 // pred_check_branch
          %335 = sbr.rel (%p333) target = $region40
        $region39: #{tpu_custom_call.1} parent=11 // pred_region
          %s337 = ssub.s32 2048, 2048
          %338 = vsyncadd [#allocation11], %s337
          %s339 = sshll.u32 [#allocation10], 4
          %s340 = int_to_ptr.vmem [resolvable:$true] %s339
          %345 = dma.hbm_to_vmem [thread:$0]  %s8, 2048, %s340, [#allocation11], 128, 128, 8
        $region40: #{tpu_custom_call.1} parent=11 // pred_fallthru
          _
        // Predicated region
        $region41: #{tpu_custom_call.1} parent=11 // pred_check
          %p346 = pneg %p244
        $region42: #{tpu_custom_call.1} parent=11 // pred_check_branch
          %348 = sbr.rel (%p346) target = $region44
        $region43: #{tpu_custom_call.1} parent=11 // pred_region
          _
        $region44: #{tpu_custom_call.1} parent=11 // pred_fallthru
          _
      $region12: #{tpu_custom_call.1} parent=5 // pred_fallthru
        _
      %p349 = scmp.lt.s32.totalorder %s24, 3
      // Predicated region
      $region45: #{tpu_custom_call.1} parent=5 // pred_check
        %p350 = pneg %p349
      $region46: #{tpu_custom_call.1} parent=5 // pred_check_branch
        %352 = sbr.rel (%p350) target = $region48
      $region47: #{tpu_custom_call.1} parent=5 // pred_region
        // Predicated region
        $region49: #{tpu_custom_call.1} parent=47 // pred_check
          %p353 = pneg %p44
        $region50: #{tpu_custom_call.1} parent=47 // pred_check_branch
          %355 = sbr.rel (%p353) target = $region52
        $region51: #{tpu_custom_call.1} parent=47 // pred_region
          %s356 = sand.u32 %s34, 1
          %s357 = scalar_lea.sflag [#allocation3], %s356
          %s358 = sand.u32 %s34, 1
          %s359 = smul.addr %s358, 8
          %s360 = scalar_lea.vmem [#allocation2], %s359
          %s362 = ssub.s32 128, 128
          %363 = vsyncadd %s357, %s362
          %s364 = smul.addr %s24, 128
          %s365 = scalar_lea.hbm %s0, %s364
          %s367 = sshll.u32 %s360, 4
          %s368 = int_to_ptr.vmem [resolvable:$true] %s367
          %370 = dma.hbm_to_vmem [thread:$0]  %s365, 128, %s368, %s357
        $region52: #{tpu_custom_call.1} parent=47 // pred_fallthru
          _
        // Predicated region
        $region53: #{tpu_custom_call.1} parent=47 // pred_check
          %p371 = pneg %p70
        $region54: #{tpu_custom_call.1} parent=47 // pred_check_branch
          %373 = sbr.rel (%p371) target = $region56
        $region55: #{tpu_custom_call.1} parent=47 // pred_region
          %s374 = sand.u32 %s24, 1
          %s375 = scalar_lea.sflag [#allocation5], %s374
          %s376 = sand.u32 %s60, 1
          %s377 = smul.addr %s376, 8
          %s378 = scalar_lea.vmem [#allocation4], %s377
          %s380 = ssub.s32 128, 128
          %381 = vsyncadd %s375, %s380
          %s382 = smul.addr %s24, 128
          %s383 = scalar_lea.hbm %s1, %s382
          %s385 = sshll.u32 %s378, 4
          %s386 = int_to_ptr.vmem [resolvable:$true] %s385
          %388 = dma.hbm_to_vmem [thread:$0]  %s383, 128, %s386, %s375
        $region56: #{tpu_custom_call.1} parent=47 // pred_fallthru
          _
      $region48: #{tpu_custom_call.1} parent=5 // pred_fallthru
        _
      %p389 = scmp.le.s32.totalorder 1, %s24
      %p390 = scmp.lt.s32.totalorder %s24, 4
      %p391 = pnand %p389, %p390
      %p392 = pneg %p391
      // Predicated region
      $region57: #{tpu_custom_call.1} parent=5 // pred_check
        _
      $region58: #{tpu_custom_call.1} parent=5 // pred_check_branch
        %394 = sbr.rel (%p391) target = $region60
      $region59: #{tpu_custom_call.1} parent=5 // pred_region
        %s395 = ssub.s32 %s24, 1
        %s396 = sand.u32 %s37, 1
        %s397 = scalar_lea.sflag [#allocation3], %s396
        %s398 = sand.u32 %s37, 1
        %s399 = smul.addr %s398, 8
        %s400 = scalar_lea.vmem [#allocation2], %s399
        // Predicated region
        $region61: #{tpu_custom_call.1} parent=59 // pred_check
          %p401 = pneg %p50
        $region62: #{tpu_custom_call.1} parent=59 // pred_check_branch
          %403 = sbr.rel (%p401) target = $region64
        $region63: #{tpu_custom_call.1} parent=59 // pred_region
          %404 = dma.done %s397, 128
        $region64: #{tpu_custom_call.1} parent=59 // pred_fallthru
          _
        %s405 = sand.u32 %s29, 1
        %s406 = scalar_lea.sflag [#allocation5], %s405
        %s407 = sand.u32 %s63, 1
        %s408 = smul.addr %s407, 8
        %s409 = scalar_lea.vmem [#allocation4], %s408
        // Predicated region
        $region65: #{tpu_custom_call.1} parent=59 // pred_check
          %p410 = pneg %p76
        $region66: #{tpu_custom_call.1} parent=59 // pred_check_branch
          %412 = sbr.rel (%p410) target = $region68
        $region67: #{tpu_custom_call.1} parent=59 // pred_region
          %413 = dma.done %s406, 128
        $region68: #{tpu_custom_call.1} parent=59 // pred_fallthru
          _
        // Predicated region
        $region69: #{tpu_custom_call.1} parent=59 // pred_check
          %p414 = pneg %p97
        $region70: #{tpu_custom_call.1} parent=59 // pred_check_branch
          %416 = sbr.rel (%p414) target = $region72
        $region71: #{tpu_custom_call.1} parent=59 // pred_region
          %417 = dma.done [#allocation5], 512
        $region72: #{tpu_custom_call.1} parent=59 // pred_fallthru
          _
        // Predicated region
        $region73: #{tpu_custom_call.1} parent=59 // pred_check
          %p418 = pneg %p139
        $region74: #{tpu_custom_call.1} parent=59 // pred_check_branch
          %420 = sbr.rel (%p418) target = $region76
        $region75: #{tpu_custom_call.1} parent=59 // pred_region
          %421 = dma.done [#allocation8], 768
        $region76: #{tpu_custom_call.1} parent=59 // pred_fallthru
          _
        // Predicated region
        $region77: #{tpu_custom_call.1} parent=59 // pred_check
          %p422 = pneg %p181
        $region78: #{tpu_custom_call.1} parent=59 // pred_check_branch
          %424 = sbr.rel (%p422) target = $region80
        $region79: #{tpu_custom_call.1} parent=59 // pred_region
          %425 = dma.done [#allocation8], 2048
        $region80: #{tpu_custom_call.1} parent=59 // pred_fallthru
          _
        // Predicated region
        $region81: #{tpu_custom_call.1} parent=59 // pred_check
          %p426 = pneg %p223
        $region82: #{tpu_custom_call.1} parent=59 // pred_check_branch
          %428 = sbr.rel (%p426) target = $region84
        $region83: #{tpu_custom_call.1} parent=59 // pred_region
          %429 = dma.done [#allocation11], 2048
        $region84: #{tpu_custom_call.1} parent=59 // pred_fallthru
          _
        %s430 = sand.u32 %s37, 1
        %s431 = scalar_lea.sflag [#allocation3], %s430
        %s432 = sand.u32 %s37, 1
        %s433 = smul.addr %s432, 8
        %s434 = scalar_lea.vmem [#allocation2], %s433
        %p435 = pneg %p50
        %p436 = pneg %p47
        %s437 = sand.u32 %s29, 1
        %s438 = scalar_lea.sflag [#allocation5], %s437
        %s439 = sand.u32 %s63, 1
        %s440 = smul.addr %s439, 8
        %s441 = scalar_lea.vmem [#allocation4], %s440
        %p442 = pneg %p76
        %p443 = pneg %p73
        %p444 = pneg %p97
        %p445 = pneg %p94
        %p446 = pneg %p118
        %p447 = pneg %p115
        %p448 = pneg %p139
        %p449 = pneg %p136
        %p450 = pneg %p160
        %p451 = pneg %p157
        %p452 = pneg %p181
        %p453 = pneg %p178
        %p454 = pneg %p202
        %p455 = pneg %p199
        %p456 = pneg %p223
        %p457 = pneg %p220
        %p458 = pneg %p244
        %p459 = pneg %p241
        %p460 = pneg %p270
        %p461 = pneg %p267
        %p462 = scmp.lt.s32.totalorder %s29, 2
        %s463 = scalar_select %p462, %s29, 2
        %s464 = smul.addr %s463, 8
        %s465 = scalar_lea.vmem %s10, %s464
        %p466 = scmp.lt.s32.totalorder %s29, 2
        %s467 = scalar_select %p466, %s29, 2
        %s468 = smul.addr %s467, 8
        %s469 = scalar_lea.vmem %s10, %s468
        %v470 = vld [vmem:[%s400] sm:$0xff]
        %v471 = vld [vmem:[#allocation6] sm:$0xff]
        %v472 = vld [vmem:[#allocation6 + $0x8] sm:$0xff]
        %v473 = vld [vmem:[#allocation6 + $0x10] sm:$0xff]
        %v474 = vld [vmem:[#allocation6 + $0x18] sm:$0xff]
        %v475 = vld [vmem:[%s3] sm:$0x1]
        %v477 = vlaneseq
        %v478 = vshrl.u32 %v477, 7
        %v479 = vsub.s32 0, %v478
        %v480 = vrot.slane %v475, %v479
        %vm482 = vcmask 261120
        %v484 = vsel %vm482, %v470, 0
        %486 = vmatprep.subr.mxu0 0.0
        %487 = vmatpush1.msra.mxu0 0.0
        %488 = vmatprep.subr.mxu0 0.0
        %489 = vmatpush1.msra.mxu0 0.0
        %490 = vmatprep.subr.mxu0 0.0
        %491 = vmatpush1.msra.mxu0 0.0
        %492 = vmatprep.subr.mxu0 0.0
        %493 = vmatpush1.msra.mxu0 0.0
        %494 = vmatprep.subr.mxu0 0.0
        %495 = vmatpush1.msra.mxu0 0.0
        %496 = vmatprep.subr.mxu0 0.0
        %497 = vmatpush1.msra.mxu0 0.0
        %498 = vmatprep.subr.mxu0 0.0
        %499 = vmatpush1.msra.mxu0 0.0
        %500 = vmatprep.subr.mxu0 0.0
        %501 = vmatpush1.msra.mxu0 0.0
        %502 = vmatprep.subr.mxu0 0.0
        %503 = vmatpush1.msra.mxu0 0.0
        %504 = vmatprep.subr.mxu0 0.0
        %505 = vmatpush1.msra.mxu0 0.0
        %506 = vmatprep.subr.mxu0 0.0
        %507 = vmatpush1.msra.mxu0 0.0
        %508 = vmatprep.subr.mxu0 0.0
        %509 = vmatpush1.msra.mxu0 0.0
        %510 = vmatprep.subr.mxu0 0.0
        %511 = vmatpush1.msra.mxu0 %v474
        %512 = vmatprep.subr.mxu0 0.0
        %513 = vmatpush1.msra.mxu0 %v473
        %514 = vmatprep.subr.mxu0 0.0
        %515 = vmatpush1.msra.mxu0 %v472
        %516 = vmatprep.subr.mxu0 0.0
        %517 = vmatpush1.msra.mxu0 %v471
        %518 = vmatprep.subr.mxu0 0.0
        %519 = vmatpush2.msra.mxu0 0.0
        %520 = vmatprep.subr.mxu0 0.0
        %521 = vmatpush2.msra.mxu0 0.0
        %522 = vmatprep.subr.mxu0 0.0
        %523 = vmatpush2.msra.mxu0 0.0
        %524 = vmatprep.subr.mxu0 0.0
        %525 = vmatpush2.msra.mxu0 0.0
        %526 = vmatprep.subr.mxu0 0.0
        %527 = vmatpush2.msra.mxu0 0.0
        %528 = vmatprep.subr.mxu0 0.0
        %529 = vmatpush2.msra.mxu0 0.0
        %530 = vmatprep.subr.mxu0 0.0
        %531 = vmatpush2.msra.mxu0 0.0
        %532 = vmatprep.subr.mxu0 0.0
        %533 = vmatpush2.msra.mxu0 0.0
        %534 = vmatprep.subr.mxu0 0.0
        %535 = vmatpush2.msra.mxu0 0.0
        %536 = vmatprep.subr.mxu0 0.0
        %537 = vmatpush2.msra.mxu0 0.0
        %538 = vmatprep.subr.mxu0 0.0
        %539 = vmatpush2.msra.mxu0 0.0
        %540 = vmatprep.subr.mxu0 0.0
        %541 = vmatpush2.msra.mxu0 0.0
        %542 = vmatprep.subr.mxu0 0.0
        %543 = vmatpush2.msra.mxu0 0.0
        %544 = vmatprep.subr.mxu0 0.0
        %545 = vmatpush2.msra.mxu0 0.0
        %546 = vmatprep.subr.mxu0 0.0
        %547 = vmatpush2.msra.mxu0 0.0
        %548 = vmatprep.subr.mxu0 0.0
        %549 = vmatpush2.msra.mxu0 0.0
        %550 = vmatprep.mubr.f32.mxu0 0.0
        %551 = vmatmul.mubr.f32.gmra.mxu0 %v484
        %v552 = vpop.f32.mrf.mxu0
        %v553 = vadd.f32 %v480, %v552
        %v554 = vpop.f32.mrf.mxu0
        %555 = vdwg.mxu0
        %v556 = vmax.f32 %v553, 0.0
        %v557 = vld [vmem:[%s409] sm:$0xff]
        %v558 = vld [vmem:[#allocation7] sm:$0xff]
        %v559 = vld [vmem:[#allocation7 + $0x8] sm:$0xff]
        %v560 = vld [vmem:[#allocation7 + $0x10] sm:$0xff]
        %v561 = vld [vmem:[#allocation7 + $0x18] sm:$0xff]
        %v562 = vld [vmem:[#allocation7 + $0x20] sm:$0xff]
        %v563 = vld [vmem:[#allocation7 + $0x28] sm:$0xff]
        %v564 = vld [vmem:[%s5] sm:$0x1]
        %v566 = vlaneseq
        %v567 = vshrl.u32 %v566, 7
        %v568 = vsub.s32 0, %v567
        %v569 = vrot.slane %v564, %v568
        %vm571 = vcmask 392192
        %v573 = vsel %vm571, %v557, 0
        %575 = vmatprep.subr.mxu0 0.0
        %576 = vmatpush1.msra.mxu0 0.0
        %577 = vmatprep.subr.mxu0 0.0
        %578 = vmatpush1.msra.mxu0 0.0
        %579 = vmatprep.subr.mxu0 0.0
        %580 = vmatpush1.msra.mxu0 0.0
        %581 = vmatprep.subr.mxu0 0.0
        %582 = vmatpush1.msra.mxu0 0.0
        %583 = vmatprep.subr.mxu0 0.0
        %584 = vmatpush1.msra.mxu0 0.0
        %585 = vmatprep.subr.mxu0 0.0
        %586 = vmatpush1.msra.mxu0 0.0
        %587 = vmatprep.subr.mxu0 0.0
        %588 = vmatpush1.msra.mxu0 0.0
        %589 = vmatprep.subr.mxu0 0.0
        %590 = vmatpush1.msra.mxu0 0.0
        %591 = vmatprep.subr.mxu0 0.0
        %592 = vmatpush1.msra.mxu0 0.0
        %593 = vmatprep.subr.mxu0 0.0
        %594 = vmatpush1.msra.mxu0 0.0
        %595 = vmatprep.subr.mxu0 0.0
        %596 = vmatpush1.msra.mxu0 %v563
        %597 = vmatprep.subr.mxu0 0.0
        %598 = vmatpush1.msra.mxu0 %v562
        %599 = vmatprep.subr.mxu0 0.0
        %600 = vmatpush1.msra.mxu0 %v561
        %601 = vmatprep.subr.mxu0 0.0
        %602 = vmatpush1.msra.mxu0 %v560
        %603 = vmatprep.subr.mxu0 0.0
        %604 = vmatpush1.msra.mxu0 %v559
        %605 = vmatprep.subr.mxu0 0.0
        %606 = vmatpush1.msra.mxu0 %v558
        %607 = vmatprep.subr.mxu0 0.0
        %608 = vmatpush2.msra.mxu0 0.0
        %609 = vmatprep.subr.mxu0 0.0
        %610 = vmatpush2.msra.mxu0 0.0
        %611 = vmatprep.subr.mxu0 0.0
        %612 = vmatpush2.msra.mxu0 0.0
        %613 = vmatprep.subr.mxu0 0.0
        %614 = vmatpush2.msra.mxu0 0.0
        %615 = vmatprep.subr.mxu0 0.0
        %616 = vmatpush2.msra.mxu0 0.0
        %617 = vmatprep.subr.mxu0 0.0
        %618 = vmatpush2.msra.mxu0 0.0
        %619 = vmatprep.subr.mxu0 0.0
        %620 = vmatpush2.msra.mxu0 0.0
        %621 = vmatprep.subr.mxu0 0.0
        %622 = vmatpush2.msra.mxu0 0.0
        %623 = vmatprep.subr.mxu0 0.0
        %624 = vmatpush2.msra.mxu0 0.0
        %625 = vmatprep.subr.mxu0 0.0
        %626 = vmatpush2.msra.mxu0 0.0
        %627 = vmatprep.subr.mxu0 0.0
        %628 = vmatpush2.msra.mxu0 0.0
        %629 = vmatprep.subr.mxu0 0.0
        %630 = vmatpush2.msra.mxu0 0.0
        %631 = vmatprep.subr.mxu0 0.0
        %632 = vmatpush2.msra.mxu0 0.0
        %633 = vmatprep.subr.mxu0 0.0
        %634 = vmatpush2.msra.mxu0 0.0
        %635 = vmatprep.subr.mxu0 0.0
        %636 = vmatpush2.msra.mxu0 0.0
        %637 = vmatprep.subr.mxu0 0.0
        %638 = vmatpush2.msra.mxu0 0.0
        %639 = vmatprep.mubr.f32.mxu0 0.0
        %640 = vmatmul.mubr.f32.gmra.mxu0 %v573
        %v641 = vpop.f32.mrf.mxu0
        %v642 = vadd.f32 %v569, %v641
        %v643 = vpop.f32.mrf.mxu0
        %644 = vdwg.mxu0
        %v645 = vmax.f32 %v642, 0.0
        %v646 = vmul.f32 %v556, %v645
        %v647 = vld [vmem:[#allocation9] sm:$0xff]
        %v648 = vld [vmem:[#allocation9 + $0x8] sm:$0xff]
        %v649 = vld [vmem:[#allocation9 + $0x10] sm:$0xff]
        %v650 = vld [vmem:[#allocation9 + $0x18] sm:$0xff]
        %v651 = vld [vmem:[#allocation9 + $0x20] sm:$0xff]
        %v652 = vld [vmem:[#allocation9 + $0x28] sm:$0xff]
        %v653 = vld [vmem:[#allocation9 + $0x30] sm:$0xff]
        %v654 = vld [vmem:[#allocation9 + $0x38] sm:$0xff]
        %v655 = vld [vmem:[#allocation9 + $0x40] sm:$0xff]
        %v656 = vld [vmem:[#allocation9 + $0x48] sm:$0xff]
        %v657 = vld [vmem:[#allocation9 + $0x50] sm:$0xff]
        %v658 = vld [vmem:[#allocation9 + $0x58] sm:$0xff]
        %v659 = vld [vmem:[#allocation9 + $0x60] sm:$0xff]
        %v660 = vld [vmem:[#allocation9 + $0x68] sm:$0xff]
        %v661 = vld [vmem:[#allocation9 + $0x70] sm:$0xff]
        %v662 = vld [vmem:[#allocation9 + $0x78] sm:$0xff]
        %v663 = vld [vmem:[%s7] sm:$0x1]
        %v665 = vlaneseq
        %v666 = vshrl.u32 %v665, 7
        %v667 = vsub.s32 0, %v666
        %v668 = vrot.slane %v663, %v667
        %670 = vmatprep.subr.mxu0 0.0
        %671 = vmatpush1.msra.mxu0 %v662
        %672 = vmatprep.subr.mxu0 0.0
        %673 = vmatpush1.msra.mxu0 %v661
        %674 = vmatprep.subr.mxu0 0.0
        %675 = vmatpush1.msra.mxu0 %v660
        %676 = vmatprep.subr.mxu0 0.0
        %677 = vmatpush1.msra.mxu0 %v659
        %678 = vmatprep.subr.mxu0 0.0
        %679 = vmatpush1.msra.mxu0 %v658
        %680 = vmatprep.subr.mxu0 0.0
        %681 = vmatpush1.msra.mxu0 %v657
        %682 = vmatprep.subr.mxu0 0.0
        %683 = vmatpush1.msra.mxu0 %v656
        %684 = vmatprep.subr.mxu0 0.0
        %685 = vmatpush1.msra.mxu0 %v655
        %686 = vmatprep.subr.mxu0 0.0
        %687 = vmatpush1.msra.mxu0 %v654
        %688 = vmatprep.subr.mxu0 0.0
        %689 = vmatpush1.msra.mxu0 %v653
        %690 = vmatprep.subr.mxu0 0.0
        %691 = vmatpush1.msra.mxu0 %v652
        %692 = vmatprep.subr.mxu0 0.0
        %693 = vmatpush1.msra.mxu0 %v651
        %694 = vmatprep.subr.mxu0 0.0
        %695 = vmatpush1.msra.mxu0 %v650
        %696 = vmatprep.subr.mxu0 0.0
        %697 = vmatpush1.msra.mxu0 %v649
        %698 = vmatprep.subr.mxu0 0.0
        %699 = vmatpush1.msra.mxu0 %v648
        %700 = vmatprep.subr.mxu0 0.0
        %701 = vmatpush1.msra.mxu0 %v647
        %702 = vmatprep.subr.mxu0 0.0
        %703 = vmatpush2.msra.mxu0 0.0
        %704 = vmatprep.subr.mxu0 0.0
        %705 = vmatpush2.msra.mxu0 0.0
        %706 = vmatprep.subr.mxu0 0.0
        %707 = vmatpush2.msra.mxu0 0.0
        %708 = vmatprep.subr.mxu0 0.0
        %709 = vmatpush2.msra.mxu0 0.0
        %710 = vmatprep.subr.mxu0 0.0
        %711 = vmatpush2.msra.mxu0 0.0
        %712 = vmatprep.subr.mxu0 0.0
        %713 = vmatpush2.msra.mxu0 0.0
        %714 = vmatprep.subr.mxu0 0.0
        %715 = vmatpush2.msra.mxu0 0.0
        %716 = vmatprep.subr.mxu0 0.0
        %717 = vmatpush2.msra.mxu0 0.0
        %718 = vmatprep.subr.mxu0 0.0
        %719 = vmatpush2.msra.mxu0 0.0
        %720 = vmatprep.subr.mxu0 0.0
        %721 = vmatpush2.msra.mxu0 0.0
        %722 = vmatprep.subr.mxu0 0.0
        %723 = vmatpush2.msra.mxu0 0.0
        %724 = vmatprep.subr.mxu0 0.0
        %725 = vmatpush2.msra.mxu0 0.0
        %726 = vmatprep.subr.mxu0 0.0
        %727 = vmatpush2.msra.mxu0 0.0
        %728 = vmatprep.subr.mxu0 0.0
        %729 = vmatpush2.msra.mxu0 0.0
        %730 = vmatprep.subr.mxu0 0.0
        %731 = vmatpush2.msra.mxu0 0.0
        %732 = vmatprep.subr.mxu0 0.0
        %733 = vmatpush2.msra.mxu0 0.0
        %734 = vmatprep.mubr.f32.mxu0 0.0
        %735 = vmatmul.mubr.f32.gmra.mxu0 %v646
        %v736 = vpop.f32.mrf.mxu0
        %v737 = vadd.f32 %v668, %v736
        %v738 = vpop.f32.mrf.mxu0
        %739 = vdwg.mxu0
        %v740 = vmax.f32 %v737, 0.0
        %v741 = vld [vmem:[#allocation10] sm:$0xff]
        %v742 = vld [vmem:[#allocation10 + $0x8] sm:$0xff]
        %v743 = vld [vmem:[#allocation10 + $0x10] sm:$0xff]
        %v744 = vld [vmem:[#allocation10 + $0x18] sm:$0xff]
        %v745 = vld [vmem:[#allocation10 + $0x20] sm:$0xff]
        %v746 = vld [vmem:[#allocation10 + $0x28] sm:$0xff]
        %v747 = vld [vmem:[#allocation10 + $0x30] sm:$0xff]
        %v748 = vld [vmem:[#allocation10 + $0x38] sm:$0xff]
        %v749 = vld [vmem:[#allocation10 + $0x40] sm:$0xff]
        %v750 = vld [vmem:[#allocation10 + $0x48] sm:$0xff]
        %v751 = vld [vmem:[#allocation10 + $0x50] sm:$0xff]
        %v752 = vld [vmem:[#allocation10 + $0x58] sm:$0xff]
        %v753 = vld [vmem:[#allocation10 + $0x60] sm:$0xff]
        %v754 = vld [vmem:[#allocation10 + $0x68] sm:$0xff]
        %v755 = vld [vmem:[#allocation10 + $0x70] sm:$0xff]
        %v756 = vld [vmem:[#allocation10 + $0x78] sm:$0xff]
        %v757 = vld [vmem:[%s9] sm:$0x1]
        %v759 = vlaneseq
        %v760 = vshrl.u32 %v759, 7
        %v761 = vsub.s32 0, %v760
        %v762 = vrot.slane %v757, %v761
        %764 = vmatprep.subr.mxu0 0.0
        %765 = vmatpush1.msra.mxu0 %v756
        %766 = vmatprep.subr.mxu0 0.0
        %767 = vmatpush1.msra.mxu0 %v755
        %768 = vmatprep.subr.mxu0 0.0
        %769 = vmatpush1.msra.mxu0 %v754
        %770 = vmatprep.subr.mxu0 0.0
        %771 = vmatpush1.msra.mxu0 %v753
        %772 = vmatprep.subr.mxu0 0.0
        %773 = vmatpush1.msra.mxu0 %v752
        %774 = vmatprep.subr.mxu0 0.0
        %775 = vmatpush1.msra.mxu0 %v751
        %776 = vmatprep.subr.mxu0 0.0
        %777 = vmatpush1.msra.mxu0 %v750
        %778 = vmatprep.subr.mxu0 0.0
        %779 = vmatpush1.msra.mxu0 %v749
        %780 = vmatprep.subr.mxu0 0.0
        %781 = vmatpush1.msra.mxu0 %v748
        %782 = vmatprep.subr.mxu0 0.0
        %783 = vmatpush1.msra.mxu0 %v747
        %784 = vmatprep.subr.mxu0 0.0
        %785 = vmatpush1.msra.mxu0 %v746
        %786 = vmatprep.subr.mxu0 0.0
        %787 = vmatpush1.msra.mxu0 %v745
        %788 = vmatprep.subr.mxu0 0.0
        %789 = vmatpush1.msra.mxu0 %v744
        %790 = vmatprep.subr.mxu0 0.0
        %791 = vmatpush1.msra.mxu0 %v743
        %792 = vmatprep.subr.mxu0 0.0
        %793 = vmatpush1.msra.mxu0 %v742
        %794 = vmatprep.subr.mxu0 0.0
        %795 = vmatpush1.msra.mxu0 %v741
        %796 = vmatprep.subr.mxu0 0.0
        %797 = vmatpush2.msra.mxu0 0.0
        %798 = vmatprep.subr.mxu0 0.0
        %799 = vmatpush2.msra.mxu0 0.0
        %800 = vmatprep.subr.mxu0 0.0
        %801 = vmatpush2.msra.mxu0 0.0
        %802 = vmatprep.subr.mxu0 0.0
        %803 = vmatpush2.msra.mxu0 0.0
        %804 = vmatprep.subr.mxu0 0.0
        %805 = vmatpush2.msra.mxu0 0.0
        %806 = vmatprep.subr.mxu0 0.0
        %807 = vmatpush2.msra.mxu0 0.0
        %808 = vmatprep.subr.mxu0 0.0
        %809 = vmatpush2.msra.mxu0 0.0
        %810 = vmatprep.subr.mxu0 0.0
        %811 = vmatpush2.msra.mxu0 0.0
        %812 = vmatprep.subr.mxu0 0.0
        %813 = vmatpush2.msra.mxu0 0.0
        %814 = vmatprep.subr.mxu0 0.0
        %815 = vmatpush2.msra.mxu0 0.0
        %816 = vmatprep.subr.mxu0 0.0
        %817 = vmatpush2.msra.mxu0 0.0
        %818 = vmatprep.subr.mxu0 0.0
        %819 = vmatpush2.msra.mxu0 0.0
        %820 = vmatprep.subr.mxu0 0.0
        %821 = vmatpush2.msra.mxu0 0.0
        %822 = vmatprep.subr.mxu0 0.0
        %823 = vmatpush2.msra.mxu0 0.0
        %824 = vmatprep.subr.mxu0 0.0
        %825 = vmatpush2.msra.mxu0 0.0
        %826 = vmatprep.subr.mxu0 0.0
        %827 = vmatpush2.msra.mxu0 0.0
        %828 = vmatprep.mubr.f32.mxu0 0.0
        %829 = vmatmul.mubr.f32.gmra.mxu0 %v740
        %v830 = vpop.f32.mrf.mxu0
        %v831 = vadd.f32 %v762, %v830
        %v832 = vpop.f32.mrf.mxu0
        %833 = vdwg.mxu0
        %vm834 = vcmask 130048
        %835 = vst.msk [vmem:[%s469] sm:$0xff] %vm834, %v831
        %p836 = scmp.lt.s32.totalorder %s29, 2
        %s837 = scalar_select %p836, %s29, 2
        %s838 = smul.addr %s837, 8
        %s839 = scalar_lea.vmem %s10, %s838
        // Predicated region
        $region85: #{tpu_custom_call.1} parent=59 // pred_check
          %p840 = pneg %p267
        $region86: #{tpu_custom_call.1} parent=59 // pred_check_branch
          %842 = sbr.rel (%p840) target = $region88
        $region87: #{tpu_custom_call.1} parent=59 // pred_region
          _
        $region88: #{tpu_custom_call.1} parent=59 // pred_fallthru
          _
      $region60: #{tpu_custom_call.1} parent=5 // pred_fallthru
        _
      %p843 = scmp.le.s32.totalorder 2, %s24
      // Predicated region
      $region89: #{tpu_custom_call.1} parent=5 // pred_check
        %p844 = pneg %p843
      $region90: #{tpu_custom_call.1} parent=5 // pred_check_branch
        %846 = sbr.rel (%p844) target = $region92
      $region91: #{tpu_custom_call.1} parent=5 // pred_region
        %s847 = ssub.s32 %s24, 2
        // Predicated region
        $region93: #{tpu_custom_call.1} parent=91 // pred_check
          %p848 = pneg %p273
        $region94: #{tpu_custom_call.1} parent=91 // pred_check_branch
          %850 = sbr.rel (%p848) target = $region96
        $region95: #{tpu_custom_call.1} parent=91 // pred_region
          %p851 = scmp.lt.s32.totalorder %s30, 2
          %s852 = scalar_select %p851, %s30, 2
          %s853 = smul.addr %s852, 8
          %s854 = scalar_lea.vmem %s10, %s853
        $region96: #{tpu_custom_call.1} parent=91 // pred_fallthru
          _
      $region92: #{tpu_custom_call.1} parent=5 // pred_fallthru
        _
    $region6: #{tpu_custom_call.1} parent=1 // loop_footer
      %s28 = sadd.s32 1, %s24
    $region7: #{tpu_custom_call.1} parent=1 // loop_footer_branch
      %23 = sbr.rel target = $region3
    $region8: #{tpu_custom_call.1} parent=1 // loop_exit
      _
    %855 = vsyncpa [#allocation3], 1
    %s856 = scalar_lea.sflag [#allocation3], 1
    %857 = vsyncpa %s856, 1
    %858 = vsyncpa [#allocation5], 1
    %s859 = scalar_lea.sflag [#allocation5], 1
    %860 = vsyncpa %s859, 1
    %861 = vsyncpa [#allocation8], 1
    %862 = vsyncpa [#allocation11], 1

</llo_original>
